<compile_context>
chip_gen: v5e
topology: v5e:2x2
jax: 0.10.0
libtpu: 0.0.40
codegen_flags: <defaults>
</compile_context>

<pallas_src>
import jax
import jax.numpy as jnp
from jax.experimental import pallas as pl
from jax.experimental.pallas import tpu as pltpu


def _softplus(x):
    # Single-exp numerically stable softplus: log(1 + exp(x)).
    return jnp.maximum(x, 0.0) + jnp.log1p(jnp.exp(-jnp.abs(x)))


def beta_actor_kernel(state_ref, w1_ref, b1_ref, w2_ref, b2_ref,
                      wh_ref, bh_ref, out_ref):
    x = state_ref[...]                                                  # [TB, S]

    # Layer 1: Linear + tanh (MXU matmul, f32 accumulate)
    h1 = jnp.tanh(
        jnp.dot(x, w1_ref[...], preferred_element_type=jnp.float32) + b1_ref[...])

    # Layer 2: Linear + tanh
    h2 = jnp.tanh(
        jnp.dot(h1, w2_ref[...], preferred_element_type=jnp.float32) + b2_ref[...])

    # Fused (alpha|beta) head, lane-padded to 128: Linear + softplus + 1
    z = jnp.dot(h2, wh_ref[...], preferred_element_type=jnp.float32) + bh_ref[...]
    out_ref[...] = _softplus(z) + 1.0                                   # [TB, 128]


def beta_actor_forward(state, params, *, tb=None):
    """state: [B, state_dim] f32. params: dict of transposed weights + [1, d] biases.

    Returns (alpha, beta), each [B, action_dim].
    """
    B, S = state.shape
    W = params["w1"].shape[1]
    A = params["wa"].shape[1]

    # --- fuse the two heads and pad to a lane-dense (multiple-of-128) width ---
    n_head = 2 * A
    head_pad = max(128, ((n_head + 127) // 128) * 128)
    wh = jnp.concatenate([params["wa"], params["wb"]], axis=1)          # [W, 2A]
    bh = jnp.concatenate([params["ba"], params["bb"]], axis=1)          # [1, 2A]
    wh = jnp.pad(wh, ((0, 0), (0, head_pad - n_head)))                  # [W, 128]
    bh = jnp.pad(bh, ((0, 0), (0, head_pad - n_head)))                  # [1, 128]

    # --- batch tiling: TB rows per grid step (multiple of 8), pad B if needed ---
    if tb is None:
        # Large enough to amortize per-step overhead, small enough for v7x's
        # 64 MiB VMEM (double-buffered state + output + resident weights).
        tb = 512
    tb = max(8, (tb // 8) * 8)
    tb = min(tb, ((B + 7) // 8) * 8)
    Bp = ((B + tb - 1) // tb) * tb
    state_p = jnp.pad(state, ((0, Bp - B), (0, 0))) if Bp != B else state
    grid = (Bp // tb,)

    cost = pl.CostEstimate(
        flops=2 * Bp * (S * W + W * W + W * head_pad),
        transcendentals=Bp * (2 * W + head_pad),
        bytes_accessed=4 * (Bp * S + Bp * head_pad
                            + S * W + W * W + W * head_pad + 2 * W + head_pad),
    )

    out = pl.pallas_call(
        beta_actor_kernel,
        out_shape=jax.ShapeDtypeStruct((Bp, head_pad), jnp.float32),
        grid_spec=pltpu.PrefetchScalarGridSpec(
            num_scalar_prefetch=0,
            grid=grid,
            in_specs=[
                # state streams per batch tile
                pl.BlockSpec((tb, S), lambda i: (i, 0)),
                # weights/biases stay VMEM-resident across the batch grid
                pl.BlockSpec((S, W), lambda i: (0, 0)),
                pl.BlockSpec((1, W), lambda i: (0, 0)),
                pl.BlockSpec((W, W), lambda i: (0, 0)),
                pl.BlockSpec((1, W), lambda i: (0, 0)),
                pl.BlockSpec((W, head_pad), lambda i: (0, 0)),
                pl.BlockSpec((1, head_pad), lambda i: (0, 0)),
            ],
            out_specs=pl.BlockSpec((tb, head_pad), lambda i: (i, 0)),
        ),
        compiler_params=pltpu.CompilerParams(
            dimension_semantics=("parallel",)),
        cost_estimate=cost,
    )(state_p, params["w1"], params["b1"], params["w2"], params["b2"], wh, bh)

    # Slice off batch padding and lane padding; split fused head into alpha/beta.
    alpha = out[:B, :A]
    beta = out[:B, A:2 * A]
    return alpha, beta


def init_params(key, state_dim, action_dim, net_width):
    """Deterministic synthetic init. Weights stored transposed: [in, out]."""
    ks = jax.random.split(key, 8)

    def lin(kw, kb, fan_in, fan_out):
        # Mimic PyTorch default uniform(-1/sqrt(fan_in), 1/sqrt(fan_in))
        bound = 1.0 / jnp.sqrt(jnp.float32(fan_in))
        w = jax.random.uniform(kw, (fan_in, fan_out), jnp.float32, -bound, bound)
        b = jax.random.uniform(kb, (1, fan_out), jnp.float32, -bound, bound)
        return w, b

    w1, b1 = lin(ks[0], ks[1], state_dim, net_width)
    w2, b2 = lin(ks[2], ks[3], net_width, net_width)
    wa, ba = lin(ks[4], ks[5], net_width, action_dim)
    wb, bb = lin(ks[6], ks[7], net_width, action_dim)
    return dict(w1=w1, b1=b1, w2=w2, b2=b2, wa=wa, ba=ba, wb=wb, bb=bb)


def reference_forward(state, p):
    h1 = jnp.tanh(state @ p["w1"] + p["b1"])
    h2 = jnp.tanh(h1 @ p["w2"] + p["b2"])
    alpha = jax.nn.softplus(h2 @ p["wa"] + p["ba"]) + 1.0
    beta = jax.nn.softplus(h2 @ p["wb"] + p["bb"]) + 1.0
    return alpha, beta


if __name__ == "__main__":
    key = jax.random.PRNGKey(0)
    k_state, k_params = jax.random.split(key)

    B, state_dim, action_dim, net_width = 8, 16, 4, 32

    state = jax.random.normal(k_state, (B, state_dim), jnp.float32)
    params = init_params(k_params, state_dim, action_dim, net_width)

    alpha, beta = beta_actor_forward(state, params)
    jax.block_until_ready((alpha, beta))

    # Correctness check against pure-JAX reference.
    alpha_ref, beta_ref = reference_forward(state, params)
    assert alpha.shape == (B, action_dim) and beta.shape == (B, action_dim)
    assert jnp.allclose(alpha, alpha_ref, atol=1e-5, rtol=1e-5)
    assert jnp.allclose(beta, beta_ref, atol=1e-5, rtol=1e-5)
    assert bool(jnp.all(alpha > 1.0)) and bool(jnp.all(beta > 1.0))

    print("KERNEL_OK")
</pallas_src>

<mosaic_0001>
module attributes {stable_mosaic.version = 11 : i64} {
  func.func @beta_actor_kernel(%arg0: i32, %arg1: memref<8x16xf32, #tpu.memory_space<vmem>>, %arg2: memref<16x32xf32, #tpu.memory_space<vmem>>, %arg3: memref<1x32xf32, #tpu.memory_space<vmem>>, %arg4: memref<32x32xf32, #tpu.memory_space<vmem>>, %arg5: memref<1x32xf32, #tpu.memory_space<vmem>>, %arg6: memref<32x128xf32, #tpu.memory_space<vmem>>, %arg7: memref<1x128xf32, #tpu.memory_space<vmem>>, %arg8: memref<8x128xf32, #tpu.memory_space<vmem>>) attributes {dimension_semantics = [#tpu.dimension_semantics<parallel>], iteration_bounds = array<i64: 1>, scalar_prefetch = 0 : i64, scratch_operands = 0 : i64, tpu.core_type = #tpu.core_type<tc>, window_params = [{transform_indices = @transform_0, window_bounds = array<i64: 8, 16>}, {pipeline_mode = #tpu.pipeline_mode<synchronous>, transform_indices = @transform_1, window_bounds = array<i64: 16, 32>}, {pipeline_mode = #tpu.pipeline_mode<synchronous>, transform_indices = @transform_2, window_bounds = array<i64: 1, 32>}, {pipeline_mode = #tpu.pipeline_mode<synchronous>, transform_indices = @transform_3, window_bounds = array<i64: 32, 32>}, {pipeline_mode = #tpu.pipeline_mode<synchronous>, transform_indices = @transform_4, window_bounds = array<i64: 1, 32>}, {pipeline_mode = #tpu.pipeline_mode<synchronous>, transform_indices = @transform_5, window_bounds = array<i64: 32, 128>}, {pipeline_mode = #tpu.pipeline_mode<synchronous>, transform_indices = @transform_6, window_bounds = array<i64: 1, 128>}, {transform_indices = @transform_7, window_bounds = array<i64: 8, 128>}]} {
    %c0 = arith.constant 0 : index
    %c0_0 = arith.constant 0 : index
    %0 = vector.load %arg1[%c0, %c0_0] : memref<8x16xf32, #tpu.memory_space<vmem>>, vector<8x16xf32>
    %c0_1 = arith.constant 0 : index
    %c0_2 = arith.constant 0 : index
    %1 = vector.load %arg2[%c0_1, %c0_2] : memref<16x32xf32, #tpu.memory_space<vmem>>, vector<16x32xf32>
    %cst = arith.constant dense<0.000000e+00> : vector<8x32xf32>
    %2 = tpu.matmul %0, %1, %cst {dimension_numbers = #tpu.dot_dimension_numbers<[1], [0], [0], [1], [0, 0, 1, 1], [], []>} : vector<8x16xf32>, vector<16x32xf32>, vector<8x32xf32> -> vector<8x32xf32>
    %c0_3 = arith.constant 0 : index
    %c0_4 = arith.constant 0 : index
    %3 = vector.load %arg3[%c0_3, %c0_4] : memref<1x32xf32, #tpu.memory_space<vmem>>, vector<1x32xf32>
    %4 = vector.broadcast %3 : vector<1x32xf32> to vector<8x32xf32>
    %5 = arith.addf %2, %4 : vector<8x32xf32>
    %6 = math.tanh %5 : vector<8x32xf32>
    %c0_5 = arith.constant 0 : index
    %c0_6 = arith.constant 0 : index
    %7 = vector.load %arg4[%c0_5, %c0_6] : memref<32x32xf32, #tpu.memory_space<vmem>>, vector<32x32xf32>
    %cst_7 = arith.constant dense<0.000000e+00> : vector<8x32xf32>
    %8 = tpu.matmul %6, %7, %cst_7 {dimension_numbers = #tpu.dot_dimension_numbers<[1], [0], [0], [1], [0, 0, 1, 1], [], []>} : vector<8x32xf32>, vector<32x32xf32>, vector<8x32xf32> -> vector<8x32xf32>
    %c0_8 = arith.constant 0 : index
    %c0_9 = arith.constant 0 : index
    %9 = vector.load %arg5[%c0_8, %c0_9] : memref<1x32xf32, #tpu.memory_space<vmem>>, vector<1x32xf32>
    %10 = vector.broadcast %9 : vector<1x32xf32> to vector<8x32xf32>
    %11 = arith.addf %8, %10 : vector<8x32xf32>
    %12 = math.tanh %11 : vector<8x32xf32>
    %c0_10 = arith.constant 0 : index
    %c0_11 = arith.constant 0 : index
    %13 = vector.load %arg6[%c0_10, %c0_11] : memref<32x128xf32, #tpu.memory_space<vmem>>, vector<32x128xf32>
    %cst_12 = arith.constant dense<0.000000e+00> : vector<8x128xf32>
    %14 = tpu.matmul %12, %13, %cst_12 {dimension_numbers = #tpu.dot_dimension_numbers<[1], [0], [0], [1], [0, 0, 1, 1], [], []>} : vector<8x32xf32>, vector<32x128xf32>, vector<8x128xf32> -> vector<8x128xf32>
    %c0_13 = arith.constant 0 : index
    %c0_14 = arith.constant 0 : index
    %15 = vector.load %arg7[%c0_13, %c0_14] : memref<1x128xf32, #tpu.memory_space<vmem>>, vector<1x128xf32>
    %16 = vector.broadcast %15 : vector<1x128xf32> to vector<8x128xf32>
    %17 = arith.addf %14, %16 : vector<8x128xf32>
    %cst_15 = arith.constant 0.000000e+00 : f32
    %18 = vector.broadcast %cst_15 : f32 to vector<8x128xf32>
    %19 = arith.maximumf %17, %18 : vector<8x128xf32>
    %20 = math.absf %17 : vector<8x128xf32>
    %cst_16 = arith.constant 0.000000e+00 : f32
    %21 = vector.broadcast %cst_16 : f32 to vector<8x128xf32>
    %22 = arith.subf %21, %20 : vector<8x128xf32>
    %23 = math.exp %22 : vector<8x128xf32>
    %24 = math.log1p %23 : vector<8x128xf32>
    %25 = arith.addf %19, %24 : vector<8x128xf32>
    %cst_17 = arith.constant 1.000000e+00 : f32
    %26 = vector.broadcast %cst_17 : f32 to vector<8x128xf32>
    %27 = arith.addf %25, %26 : vector<8x128xf32>
    %c0_18 = arith.constant 0 : index
    %c0_19 = arith.constant 0 : index
    %28 = vector.load %arg8[%c0_18, %c0_19] : memref<8x128xf32, #tpu.memory_space<vmem>>, vector<8x128xf32>
    tpu.vector_store %arg8[%c0_18, %c0_19], %27 {strides = array<i32>} : memref<8x128xf32, #tpu.memory_space<vmem>>, vector<8x128xf32>,
    return
  }
  func.func @transform_0(%arg0: i32) -> (i32, i32) {
    %c0_i32 = arith.constant 0 : i32
    %c0_i32_0 = arith.constant 0 : i32
    return %arg0, %c0_i32 : i32, i32
  }
  func.func @transform_1(%arg0: i32) -> (i32, i32) {
    %c0_i32 = arith.constant 0 : i32
    %c0_i32_0 = arith.constant 0 : i32
    %c0_i32_1 = arith.constant 0 : i32
    return %c0_i32, %c0_i32_0 : i32, i32
  }
  func.func @transform_2(%arg0: i32) -> (i32, i32) {
    %c0_i32 = arith.constant 0 : i32
    %c0_i32_0 = arith.constant 0 : i32
    %c0_i32_1 = arith.constant 0 : i32
    return %c0_i32, %c0_i32_0 : i32, i32
  }
  func.func @transform_3(%arg0: i32) -> (i32, i32) {
    %c0_i32 = arith.constant 0 : i32
    %c0_i32_0 = arith.constant 0 : i32
    %c0_i32_1 = arith.constant 0 : i32
    return %c0_i32, %c0_i32_0 : i32, i32
  }
  func.func @transform_4(%arg0: i32) -> (i32, i32) {
    %c0_i32 = arith.constant 0 : i32
    %c0_i32_0 = arith.constant 0 : i32
    %c0_i32_1 = arith.constant 0 : i32
    return %c0_i32, %c0_i32_0 : i32, i32
  }
  func.func @transform_5(%arg0: i32) -> (i32, i32) {
    %c0_i32 = arith.constant 0 : i32
    %c0_i32_0 = arith.constant 0 : i32
    %c0_i32_1 = arith.constant 0 : i32
    return %c0_i32, %c0_i32_0 : i32, i32
  }
  func.func @transform_6(%arg0: i32) -> (i32, i32) {
    %c0_i32 = arith.constant 0 : i32
    %c0_i32_0 = arith.constant 0 : i32
    %c0_i32_1 = arith.constant 0 : i32
    return %c0_i32, %c0_i32_0 : i32, i32
  }
  func.func @transform_7(%arg0: i32) -> (i32, i32) {
    %c0_i32 = arith.constant 0 : i32
    %c0_i32_0 = arith.constant 0 : i32
    return %arg0, %c0_i32 : i32, i32
  }
}

</mosaic_0001>

<llo_original>
// kernel: tpu_custom_call.1
$region0: #{tpu_custom_call.1}
  #allocation0 [shape = 'u32[]', space=smem, size = 0x4, offset = 0x4, fixed_abs, tag = 'smem constant byte address 0x4 - core index']
  #allocation1 [shape = 'u32[72,128]{1,0:T(1,128)}', space=vmem, size = 0x9000, scoped, tag = 'internal scratch']
  %s0 = inlined_call_operand.hbm [shape: f32[8,16], index: 0, kind: input, shape index: {}]
  %s1 = inlined_call_operand.hbm [shape: f32[16,32], index: 1, kind: input, shape index: {}]
  %s2 = inlined_call_operand.vmem [shape: f32[1,32], index: 2, kind: input, shape index: {}]
  %s3 = inlined_call_operand.hbm [shape: f32[32,32], index: 3, kind: input, shape index: {}]
  %s4 = inlined_call_operand.vmem [shape: f32[1,32], index: 4, kind: input, shape index: {}]
  %s5 = inlined_call_operand.hbm [shape: f32[32,128], index: 5, kind: input, shape index: {}]
  %s6 = inlined_call_operand.vmem [shape: f32[1,128], index: 6, kind: input, shape index: {}]
  %s7 = inlined_call_operand.hbm [shape: f32[8,128], index: 7, kind: output, shape index: {}]
  %s8 = sld [smem:[#allocation0]]
  $region54: #{tpu_custom_call.1} parent=0
    _
  %s10 = ssub.s32 1, %s8
  %s11 = scalar_select 0, %s10, %s8
  $region1: #{tpu_custom_call.1} parent=0
    #allocation2 [shape = 'u8[4096]{0}', space=vmem, size = 0x1000, scoped, tag = 'input window, operand 0, single buffered']
    #allocation3 [shape = 's32[1]{0}', space=sflag, size = 0x4, scoped, tag = 'scoped memory for tpu_custom_call.1']
    #allocation4 [shape = 's32[1]{0}', space=sflag, size = 0x4, scoped, tag = 'scoped memory for tpu_custom_call.1']
    #allocation5 [shape = 'u8[8192]{0}', space=vmem, size = 0x2000, scoped, tag = 'input window, operand 1, single buffered']
    #allocation6 [shape = 's32[1]{0}', space=sflag, size = 0x4, scoped, tag = 'scoped memory for tpu_custom_call.1']
    #allocation7 [shape = 'u8[16384]{0}', space=vmem, size = 0x4000, scoped, tag = 'input window, operand 3, single buffered']
    #allocation8 [shape = 'u8[16384]{0}', space=vmem, size = 0x4000, scoped, tag = 'input window, operand 5, single buffered']
    #allocation9 [shape = 's32[1]{0}', space=sflag, size = 0x4, scoped, tag = 'scoped memory for tpu_custom_call.1']
    #allocation10 [shape = 'u8[4096]{0}', space=vmem, size = 0x1000, scoped, tag = 'output window, operand 0, single buffered']
    %12 = vsyncpa [#allocation3], 0
    %13 = vsyncpa [#allocation6], 0
    %14 = vsyncpa [#allocation9], 0
    %15 = vsyncpa [#allocation4], 0
    // Predicated region
    $region2: #{tpu_custom_call.1} parent=1 // pred_check
      _
    $region3: #{tpu_custom_call.1} parent=1 // pred_check_branch
      %17 = sbr.rel (0) target = $region5
    $region4: #{tpu_custom_call.1} parent=1 // pred_region
      %19 = vsyncadd [#allocation3], 0
      %s21 = sshll.u32 %s0, 4
      %s22 = int_to_ptr.hbm [resolvable:$true] %s21
      %s23 = sshll.u32 [#allocation2], 4
      %s24 = int_to_ptr.vmem [resolvable:$true] %s23
      %26 = dma.hbm_to_vmem [thread:$0]  %s22, 128, %s24, [#allocation3]
    $region5: #{tpu_custom_call.1} parent=1 // pred_fallthru
      _
    // Predicated region
    $region6: #{tpu_custom_call.1} parent=1 // pred_check
      _
    $region7: #{tpu_custom_call.1} parent=1 // pred_check_branch
      %28 = sbr.rel (0) target = $region9
    $region8: #{tpu_custom_call.1} parent=1 // pred_region
      %30 = vsyncadd [#allocation6], 0
      %s31 = sshll.u32 %s1, 4
      %s32 = int_to_ptr.hbm [resolvable:$true] %s31
      %s33 = sshll.u32 [#allocation5], 4
      %s34 = int_to_ptr.vmem [resolvable:$true] %s33
      %39 = dma.hbm_to_vmem [thread:$0]  %s32, 256, %s34, [#allocation6], 128, 128, 8
    $region9: #{tpu_custom_call.1} parent=1 // pred_fallthru
      _
    // Predicated region
    $region10: #{tpu_custom_call.1} parent=1 // pred_check
      _
    $region11: #{tpu_custom_call.1} parent=1 // pred_check_branch
      %41 = sbr.rel (0) target = $region13
    $region12: #{tpu_custom_call.1} parent=1 // pred_region
      _
    $region13: #{tpu_custom_call.1} parent=1 // pred_fallthru
      _
    // Predicated region
    $region14: #{tpu_custom_call.1} parent=1 // pred_check
      _
    $region15: #{tpu_custom_call.1} parent=1 // pred_check_branch
      %43 = sbr.rel (0) target = $region17
    $region16: #{tpu_custom_call.1} parent=1 // pred_region
      %45 = vsyncadd [#allocation6], 0
      %s46 = sshll.u32 %s3, 4
      %s47 = int_to_ptr.hbm [resolvable:$true] %s46
      %s48 = sshll.u32 [#allocation7], 4
      %s49 = int_to_ptr.vmem [resolvable:$true] %s48
      %54 = dma.hbm_to_vmem [thread:$0]  %s47, 512, %s49, [#allocation6], 128, 128, 8
    $region17: #{tpu_custom_call.1} parent=1 // pred_fallthru
      _
    // Predicated region
    $region18: #{tpu_custom_call.1} parent=1 // pred_check
      _
    $region19: #{tpu_custom_call.1} parent=1 // pred_check_branch
      %56 = sbr.rel (0) target = $region21
    $region20: #{tpu_custom_call.1} parent=1 // pred_region
      _
    $region21: #{tpu_custom_call.1} parent=1 // pred_fallthru
      _
    // Predicated region
    $region22: #{tpu_custom_call.1} parent=1 // pred_check
      _
    $region23: #{tpu_custom_call.1} parent=1 // pred_check_branch
      %58 = sbr.rel (0) target = $region25
    $region24: #{tpu_custom_call.1} parent=1 // pred_region
      %60 = vsyncadd [#allocation9], 0
      %s61 = sshll.u32 %s5, 4
      %s62 = int_to_ptr.hbm [resolvable:$true] %s61
      %s63 = sshll.u32 [#allocation8], 4
      %s64 = int_to_ptr.vmem [resolvable:$true] %s63
      %69 = dma.hbm_to_vmem [thread:$0]  %s62, 512, %s64, [#allocation9], 128, 128, 8
    $region25: #{tpu_custom_call.1} parent=1 // pred_fallthru
      _
    // Predicated region
    $region26: #{tpu_custom_call.1} parent=1 // pred_check
      _
    $region27: #{tpu_custom_call.1} parent=1 // pred_check_branch
      %71 = sbr.rel (0) target = $region29
    $region28: #{tpu_custom_call.1} parent=1 // pred_region
      _
    $region29: #{tpu_custom_call.1} parent=1 // pred_fallthru
      _
    // Predicated region
    $region30: #{tpu_custom_call.1} parent=1 // pred_check
      _
    $region31: #{tpu_custom_call.1} parent=1 // pred_check_branch
      %73 = sbr.rel (0) target = $region33
    $region32: #{tpu_custom_call.1} parent=1 // pred_region
      %75 = dma.done [#allocation3], 128
    $region33: #{tpu_custom_call.1} parent=1 // pred_fallthru
      _
    // Predicated region
    $region34: #{tpu_custom_call.1} parent=1 // pred_check
      _
    $region35: #{tpu_custom_call.1} parent=1 // pred_check_branch
      %77 = sbr.rel (0) target = $region37
    $region36: #{tpu_custom_call.1} parent=1 // pred_region
      %79 = dma.done [#allocation6], 256
    $region37: #{tpu_custom_call.1} parent=1 // pred_fallthru
      _
    // Predicated region
    $region38: #{tpu_custom_call.1} parent=1 // pred_check
      _
    $region39: #{tpu_custom_call.1} parent=1 // pred_check_branch
      %81 = sbr.rel (0) target = $region41
    $region40: #{tpu_custom_call.1} parent=1 // pred_region
      %83 = dma.done [#allocation6], 512
    $region41: #{tpu_custom_call.1} parent=1 // pred_fallthru
      _
    // Predicated region
    $region42: #{tpu_custom_call.1} parent=1 // pred_check
      _
    $region43: #{tpu_custom_call.1} parent=1 // pred_check_branch
      %85 = sbr.rel (0) target = $region45
    $region44: #{tpu_custom_call.1} parent=1 // pred_region
      %87 = dma.done [#allocation9], 512
    $region45: #{tpu_custom_call.1} parent=1 // pred_fallthru
      _
    %v88 = vld [vmem:[#allocation2] sm:$0xff]
    %v89 = vld [vmem:[#allocation5] sm:$0xff]
    %v90 = vld [vmem:[#allocation5 + $0x8] sm:$0xff]
    %v91 = vld [vmem:[%s2] sm:$0x1]
    %v93 = vperm.slane %v91, 0
    %vm95 = vcmask 130048
    %v97 = vsel %vm95, %v88, 0
    %99 = vmatpush.msra.mxu0 0.0
    %100 = vmatpush.msra.mxu0 0.0
    %101 = vmatpush.msra.mxu0 0.0
    %102 = vmatpush.msra.mxu0 0.0
    %103 = vmatpush.msra.mxu0 0.0
    %104 = vmatpush.msra.mxu0 0.0
    %105 = vmatpush.msra.mxu0 0.0
    %106 = vmatpush.msra.mxu0 0.0
    %107 = vmatpush.msra.mxu0 0.0
    %108 = vmatpush.msra.mxu0 0.0
    %109 = vmatpush.msra.mxu0 0.0
    %110 = vmatpush.msra.mxu0 0.0
    %111 = vmatpush.msra.mxu0 0.0
    %112 = vmatpush.msra.mxu0 0.0
    %113 = vmatpush.msra.mxu0 %v90
    %114 = vmatpush.msra.mxu0 %v89
    %115 = vmatmul.f32.gmra.mxu0 %v97
    %v116 = vpop.f32.mrf.mxu0
    %v117 = vadd.f32 %v93, %v116
    %118 = vdwg.mxu0
    %v119 = vtanh.pop %v117
    %v120 = vld [vmem:[#allocation7] sm:$0xff]
    %v121 = vld [vmem:[#allocation7 + $0x8] sm:$0xff]
    %v122 = vld [vmem:[#allocation7 + $0x10] sm:$0xff]
    %v123 = vld [vmem:[#allocation7 + $0x18] sm:$0xff]
    %v124 = vld [vmem:[%s4] sm:$0x1]
    %v126 = vperm.slane %v124, 0
    %vm128 = vcmask 261120
    %v130 = vsel %vm128, %v119, 0
    %132 = vmatpush.msra.mxu0 0.0
    %133 = vmatpush.msra.mxu0 0.0
    %134 = vmatpush.msra.mxu0 0.0
    %135 = vmatpush.msra.mxu0 0.0
    %136 = vmatpush.msra.mxu0 0.0
    %137 = vmatpush.msra.mxu0 0.0
    %138 = vmatpush.msra.mxu0 0.0
    %139 = vmatpush.msra.mxu0 0.0
    %140 = vmatpush.msra.mxu0 0.0
    %141 = vmatpush.msra.mxu0 0.0
    %142 = vmatpush.msra.mxu0 0.0
    %143 = vmatpush.msra.mxu0 0.0
    %144 = vmatpush.msra.mxu0 %v123
    %145 = vmatpush.msra.mxu0 %v122
    %146 = vmatpush.msra.mxu0 %v121
    %147 = vmatpush.msra.mxu0 %v120
    %148 = vmatmul.f32.gmra.mxu0 %v130
    %v149 = vpop.f32.mrf.mxu0
    %v150 = vadd.f32 %v126, %v149
    %151 = vdwg.mxu0
    %v152 = vtanh.pop %v150
    %v153 = vld [vmem:[#allocation8] sm:$0xff]
    %v154 = vld [vmem:[#allocation8 + $0x8] sm:$0xff]
    %v155 = vld [vmem:[#allocation8 + $0x10] sm:$0xff]
    %v156 = vld [vmem:[#allocation8 + $0x18] sm:$0xff]
    %v157 = vld [vmem:[%s6] sm:$0x1]
    %v159 = vperm.slane %v157, 0
    %v162 = vsel %vm128, %v152, 0
    %164 = vmatpush.msra.mxu0 0.0
    %165 = vmatpush.msra.mxu0 0.0
    %166 = vmatpush.msra.mxu0 0.0
    %167 = vmatpush.msra.mxu0 0.0
    %168 = vmatpush.msra.mxu0 0.0
    %169 = vmatpush.msra.mxu0 0.0
    %170 = vmatpush.msra.mxu0 0.0
    %171 = vmatpush.msra.mxu0 0.0
    %172 = vmatpush.msra.mxu0 0.0
    %173 = vmatpush.msra.mxu0 0.0
    %174 = vmatpush.msra.mxu0 0.0
    %175 = vmatpush.msra.mxu0 0.0
    %176 = vmatpush.msra.mxu0 %v156
    %177 = vmatpush.msra.mxu0 %v155
    %178 = vmatpush.msra.mxu0 %v154
    %179 = vmatpush.msra.mxu0 %v153
    %180 = vmatmul.f32.gmra.mxu0 %v162
    %v181 = vpop.f32.mrf.mxu0
    %v182 = vadd.f32 %v159, %v181
    %183 = vdwg.mxu0
    %v184 = vmax.f32 %v182, 0.0
    %v185 = vand.u32 2147483647, %v182
    %v186 = vsub.f32 0.0, %v185
    %v187 = vmul.f32 %v186, 1.442695
    %v188 = vpow.pop %v187
    %v189 = vadd.f32 %v188, 1.0
    %v190 = vlog2.pop %v189
    %v191 = vmul.f32 %v190, 0.6931472
    %v192 = vmul.f32 -0.5, %v188
    %v193 = vadd.f32 %v192, 1.0
    %v194 = vmul.f32 %v193, %v188
    %v195 = vand.u32 2147483647, %v188
    %vm196 = vcmp.lt.f32.partialorder %v195, 0.0004427343
    %v197 = vsel %vm196, %v194, %v191
    %v198 = vadd.f32 %v184, %v197
    %v199 = vadd.f32 %v198, 1.0
    %200 = vst [vmem:[#allocation10] sm:$0xff] %v199
    // Predicated region
    $region46: #{tpu_custom_call.1} parent=1 // pred_check
      _
    $region47: #{tpu_custom_call.1} parent=1 // pred_check_branch
      %202 = sbr.rel (0) target = $region49
    $region48: #{tpu_custom_call.1} parent=1 // pred_region
      %204 = vsyncadd [#allocation4], 0
      %s206 = sshll.u32 [#allocation10], 4
      %s207 = int_to_ptr.vmem [resolvable:$true] %s206
      %s208 = sshll.u32 %s7, 4
      %s209 = int_to_ptr.hbm [resolvable:$true] %s208
      %211 = dma.vmem_to_hbm [thread:$0]  %s207, 128, %s209, [#allocation4]
    $region49: #{tpu_custom_call.1} parent=1 // pred_fallthru
      _
    // Predicated region
    $region50: #{tpu_custom_call.1} parent=1 // pred_check
      _
    $region51: #{tpu_custom_call.1} parent=1 // pred_check_branch
      %213 = sbr.rel (0) target = $region53
    $region52: #{tpu_custom_call.1} parent=1 // pred_region
      %215 = dma.done [#allocation4], 128
    $region53: #{tpu_custom_call.1} parent=1 // pred_fallthru
      _
    %216 = vsyncpa [#allocation3], 1
    %217 = vsyncpa [#allocation6], 1
    %218 = vsyncpa [#allocation9], 1
    %219 = vsyncpa [#allocation4], 1

</llo_original>
